<compile_context>
chip_gen: v7x
topology: tpu7x:2x2x1
jax: 0.10.0
libtpu: 0.0.40
codegen_flags: <defaults>
</compile_context>

<pallas_src>
import math

import jax
import jax.numpy as jnp
from jax import lax
from jax.experimental import pallas as pl
from jax.experimental.pallas import tpu as pltpu  # noqa: F401  (TPU backend)

# ---- small, module-consistent config --------------------------------------
SRC_LEN = 8           # src_len
BATCH = 2             # batch_size
HIDDEN = 32           # config.hidden_size
NUM_HEADS = 4         # config.num_attention_heads
HEAD_DIM = HIDDEN // NUM_HEADS
INTER = 4 * HIDDEN    # config.intermediate_size
EPS = 1e-12           # LayerNorm eps
NEG_INF = -1e30       # additive mask value


def bert_layer_kernel(x_ref, kvalid_ref, wqkv_ref, bqkv_ref, wo_ref,
                      w1_ref, b1_ref, w2_ref, vec_ref, out_ref):
    """Full BertLayer forward, whole batch in one invocation (seq-major rows).

    x_ref      : [B*S, H]   f32  activations, row r = s*B + b (seq-major)
    kvalid_ref : [1, B*S]   f32  1.0 = valid key, 0.0 = padded/masked key
    wqkv_ref   : [H, 3H]    bf16 fused, pre-transposed q|k|v projection
    bqkv_ref   : [1, 3H]    f32
    wo_ref     : [H, H]     bf16 out_proj weight (pre-transposed)
    w1_ref     : [H, I]     bf16
    b1_ref     : [1, I]     f32
    w2_ref     : [I, H]     bf16
    vec_ref    : [6, H]     f32  rows: bo, ln1_g, ln1_b, b2, ln2_g, ln2_b
    out_ref    : [B*S, H]   f32
    """
    H, dh, nh, B = HIDDEN, HEAD_DIM, NUM_HEADS, BATCH
    BS = BATCH * SRC_LEN

    x = x_ref[...]                                        # [BS, H] f32
    vecs = vec_ref[...]
    bo, g1, be1, b2, g2, be2 = (vecs[i:i + 1, :] for i in range(6))

    # --- additive attention bias built in-kernel, already head-stacked ------
    # rows: m = n*BS + q  (head n, query row q);  cols: key row k.
    ri = lax.broadcasted_iota(jnp.int32, (nh * BS, BS), 0)
    ci = lax.broadcasted_iota(jnp.int32, (nh * BS, BS), 1)
    if (B & (B - 1)) == 0:                                # batch id of a row = row % B
        same_batch = (ri & (B - 1)) == (ci & (B - 1))
    else:
        same_batch = (ri % B) == (ci % B)
    key_valid = kvalid_ref[...] > 0.5                     # [1, BS] bool
    allowed = jnp.logical_and(same_batch, key_valid)      # [nh*BS, BS]
    bias = jnp.where(allowed, 0.0, NEG_INF)               # f32

    # --- fused QKV projection: one MXU matmul [BS,H] @ [H,3H] ---------------
    qkv = jnp.dot(x.astype(jnp.bfloat16), wqkv_ref[...],
                  preferred_element_type=jnp.float32) + bqkv_ref[...]
    q_all = qkv[:, :H]                                    # [BS, H] f32
    k_all = qkv[:, H:2 * H].astype(jnp.bfloat16)          # [BS, H]
    v_all = qkv[:, 2 * H:3 * H].astype(jnp.bfloat16)      # [BS, H]

    # lane mask selecting head n's dh lanes: [nh, 1, H]
    lane = lax.broadcasted_iota(jnp.int32, (nh, H), 1)
    hid = lax.broadcasted_iota(jnp.int32, (nh, H), 0)
    head_mask = jnp.logical_and(lane >= hid * dh,
                                lane < (hid + 1) * dh).reshape(nh, 1, H)

    # --- head-stacked attention: 2 matmuls for all heads --------------------
    # QB[n*BS+q, :] = Q[q, :] masked to head-n lanes
    qb = jnp.where(head_mask, q_all[None, :, :], 0.0)     # [nh, BS, H]
    qb = qb.reshape(nh * BS, H).astype(jnp.bfloat16)

    scale = 1.0 / math.sqrt(dh)
    # scores for all heads at once: [nh*BS, BS]
    s = lax.dot_general(qb, k_all, (((1,), (1,)), ((), ())),
                        preferred_element_type=jnp.float32)
    s = s * scale + bias

    # one softmax pass over the stacked slab (attn dropout: identity)
    m = jnp.max(s, axis=-1, keepdims=True)
    e = jnp.exp(s - m)
    den = jnp.sum(e, axis=-1, keepdims=True)
    p = e * pl.reciprocal(den, approx=True)

    # P @ V for all heads at once, then pick each head's lanes and reduce
    r = jnp.dot(p.astype(jnp.bfloat16), v_all,
                preferred_element_type=jnp.float32)        # [nh*BS, H]
    r = r.reshape(nh, BS, H)
    ctx = jnp.sum(jnp.where(head_mask, r, 0.0), axis=0)    # [BS, H]

    # --- output projection ---------------------------------------------------
    attn = jnp.dot(ctx.astype(jnp.bfloat16), wo_ref[...],
                   preferred_element_type=jnp.float32) + bo

    # --- BertSelfOutput: dropout (identity) + residual + LayerNorm ----------
    y = x + attn
    mu = jnp.mean(y, axis=-1, keepdims=True)
    var = jnp.mean((y - mu) ** 2, axis=-1, keepdims=True)
    x1 = (y - mu) * lax.rsqrt(var + EPS) * g1 + be1

    # --- BertIntermediate: Linear(H -> I) + exact GELU (erf, as nn.GELU) ----
    h = jnp.dot(x1.astype(jnp.bfloat16), w1_ref[...],
                preferred_element_type=jnp.float32) + b1_ref[...]
    h = 0.5 * h * (1.0 + lax.erf(h * (1.0 / math.sqrt(2.0))))

    # --- BertOutput: Linear(I -> H) + dropout (identity) + residual + LN ----
    f = jnp.dot(h.astype(jnp.bfloat16), w2_ref[...],
                preferred_element_type=jnp.float32) + b2
    y2 = x1 + f
    mu2 = jnp.mean(y2, axis=-1, keepdims=True)
    var2 = jnp.mean((y2 - mu2) ** 2, axis=-1, keepdims=True)
    out_ref[...] = (y2 - mu2) * lax.rsqrt(var2 + EPS) * g2 + be2


def pack_params(params):
    """One-time weight packing (hoisted out of the per-call path)."""
    (wq, bq, wk, bk, wv, bv, wo, bo,
     g1, be1, w1, b1, w2, b2, g2, be2) = params
    H, I = HIDDEN, INTER
    wqkv_t = jnp.concatenate([wq, wk, wv], axis=0).T.astype(jnp.bfloat16)   # [H,3H]
    bqkv = jnp.concatenate([bq, bk, bv]).reshape(1, 3 * H).astype(jnp.float32)
    wo_t = wo.T.astype(jnp.bfloat16)                                        # [H,H]
    w1_t = w1.T.astype(jnp.bfloat16)                                        # [H,I]
    b1_r = b1.reshape(1, I).astype(jnp.float32)
    w2_t = w2.T.astype(jnp.bfloat16)                                        # [I,H]
    vecs = jnp.stack([bo, g1, be1, b2, g2, be2], axis=0).astype(jnp.float32)  # [6,H]
    return tuple(jax.device_put(a) for a in
                 (wqkv_t, bqkv, wo_t, w1_t, b1_r, w2_t, vecs))


@jax.jit
def bert_layer(hidden_states, attention_mask, packed):
    """hidden_states: [src_len, batch, hidden]; attention_mask: bool [batch, src_len]
    (True = padded/masked key); packed: output of pack_params.
    Returns [src_len, batch, hidden]."""
    S, B, H = hidden_states.shape
    # seq-major rows: row r = s*B + b  (no transpose in or out)
    x2d = hidden_states.reshape(S * B, H).astype(jnp.float32)
    # key-valid row in the same seq-major order
    kvalid = jnp.logical_not(attention_mask).T.reshape(1, S * B).astype(jnp.float32)

    out2d = pl.pallas_call(
        bert_layer_kernel,
        out_shape=jax.ShapeDtypeStruct((S * B, H), jnp.float32),
    )(x2d, kvalid, *packed)

    return out2d.reshape(S, B, H)


def bert_layer_reference(hidden_states, attention_mask, params):
    """Pure-JAX f32 reference of the PyTorch BertLayer forward (eval mode)."""
    (wq, bq, wk, bk, wv, bv, wo, bo,
     g1, be1, w1, b1, w2, b2, g2, be2) = params
    S, B, H = hidden_states.shape
    nh, dh = NUM_HEADS, HEAD_DIM
    x = jnp.transpose(hidden_states, (1, 0, 2)).astype(jnp.float32)  # [B,S,H]

    def heads(t):
        return t.reshape(B, S, nh, dh).transpose(0, 2, 1, 3)         # [B,nh,S,dh]

    q = heads(x @ wq.T + bq)
    k = heads(x @ wk.T + bk)
    v = heads(x @ wv.T + bv)
    scores = jnp.einsum('bnsd,bntd->bnst', q, k) / math.sqrt(dh)
    if attention_mask is not None:
        scores = scores + jnp.where(attention_mask, NEG_INF, 0.0)[:, None, None, :]
    probs = jax.nn.softmax(scores, axis=-1)
    ctx = jnp.einsum('bnst,bntd->bnsd', probs, v)
    ctx = ctx.transpose(0, 2, 1, 3).reshape(B, S, H)
    attn = ctx @ wo.T + bo

    def ln(t, g, be):
        mu = t.mean(-1, keepdims=True)
        var = ((t - mu) ** 2).mean(-1, keepdims=True)
        return (t - mu) / jnp.sqrt(var + EPS) * g + be

    x1 = ln(x + attn, g1, be1)
    h = x1 @ w1.T + b1
    h = 0.5 * h * (1.0 + lax.erf(h / math.sqrt(2.0)))
    out = ln(x1 + (h @ w2.T + b2), g2, be2)
    return jnp.transpose(out, (1, 0, 2))


def init_params(key):
    """Deterministic synthetic parameters (PyTorch Linear/MHA weight shapes)."""
    H, I = HIDDEN, INTER
    ks = jax.random.split(key, 10)
    std = 0.02
    wq = jax.random.normal(ks[0], (H, H), jnp.float32) * std
    wk = jax.random.normal(ks[1], (H, H), jnp.float32) * std
    wv = jax.random.normal(ks[2], (H, H), jnp.float32) * std
    wo = jax.random.normal(ks[3], (H, H), jnp.float32) * std
    bq = jax.random.normal(ks[4], (H,), jnp.float32) * std
    bk = jax.random.normal(ks[5], (H,), jnp.float32) * std
    bv = jax.random.normal(ks[6], (H,), jnp.float32) * std
    bo = jnp.zeros((H,), jnp.float32)
    w1 = jax.random.normal(ks[7], (I, H), jnp.float32) * std   # Linear(H -> I)
    b1 = jax.random.normal(ks[8], (I,), jnp.float32) * std
    w2 = jax.random.normal(ks[9], (H, I), jnp.float32) * std   # Linear(I -> H)
    b2 = jnp.zeros((H,), jnp.float32)
    g1 = jnp.ones((H,), jnp.float32); be1 = jnp.zeros((H,), jnp.float32)
    g2 = jnp.ones((H,), jnp.float32); be2 = jnp.zeros((H,), jnp.float32)
    return (wq, bq, wk, bk, wv, bv, wo, bo, g1, be1, w1, b1, w2, b2, g2, be2)


if __name__ == "__main__":
    key = jax.random.PRNGKey(0)
    k_x, k_p = jax.random.split(key)

    # hidden_states: [src_len, batch, hidden] (PyTorch convention)
    hidden_states = jax.random.normal(k_x, (SRC_LEN, BATCH, HIDDEN), jnp.float32)
    # padding mask: True = masked key (second sequence has 2 padded positions)
    attention_mask = jnp.array(
        [[False] * SRC_LEN,
         [False] * (SRC_LEN - 2) + [True] * 2], dtype=bool)

    params = init_params(k_p)
    packed = pack_params(params)          # one-time weight packing (not per call)

    out = jax.block_until_ready(bert_layer(hidden_states, attention_mask, packed))
    ref = jax.block_until_ready(
        bert_layer_reference(hidden_states, attention_mask, params))

    assert out.shape == (SRC_LEN, BATCH, HIDDEN)
    assert bool(jnp.all(jnp.isfinite(out)))
    max_err = float(jnp.max(jnp.abs(out - ref)))
    assert max_err < 5e-2, f"mismatch vs reference: {max_err}"
    print("KERNEL_OK")
</pallas_src>

<mosaic_0001>
module attributes {stable_mosaic.version = 11 : i64} {
  func.func @bert_layer_kernel(%arg0: memref<16x32xf32, #tpu.memory_space<vmem>>, %arg1: memref<1x16xf32, #tpu.memory_space<vmem>>, %arg2: memref<32x96xbf16, #tpu.memory_space<vmem>>, %arg3: memref<1x96xf32, #tpu.memory_space<vmem>>, %arg4: memref<32x32xbf16, #tpu.memory_space<vmem>>, %arg5: memref<32x128xbf16, #tpu.memory_space<vmem>>, %arg6: memref<1x128xf32, #tpu.memory_space<vmem>>, %arg7: memref<128x32xbf16, #tpu.memory_space<vmem>>, %arg8: memref<6x32xf32, #tpu.memory_space<vmem>>, %arg9: memref<16x32xf32, #tpu.memory_space<vmem>>) attributes {dimension_semantics = [], scalar_prefetch = 0 : i64, scratch_operands = 0 : i64, tpu.core_type = #tpu.core_type<tc>} {
    %c0 = arith.constant 0 : index
    %c0_0 = arith.constant 0 : index
    %0 = vector.load %arg0[%c0, %c0_0] : memref<16x32xf32, #tpu.memory_space<vmem>>, vector<16x32xf32>
    %c0_1 = arith.constant 0 : index
    %c0_2 = arith.constant 0 : index
    %1 = vector.load %arg8[%c0_1, %c0_2] : memref<6x32xf32, #tpu.memory_space<vmem>>, vector<6x32xf32>
    %2 = vector.extract_strided_slice %1 {offsets = [0, 0], sizes = [1, 32], strides = [1, 1]} : vector<6x32xf32> to vector<1x32xf32>
    %3 = vector.extract_strided_slice %1 {offsets = [1, 0], sizes = [1, 32], strides = [1, 1]} : vector<6x32xf32> to vector<1x32xf32>
    %4 = vector.extract_strided_slice %1 {offsets = [2, 0], sizes = [1, 32], strides = [1, 1]} : vector<6x32xf32> to vector<1x32xf32>
    %5 = vector.extract_strided_slice %1 {offsets = [3, 0], sizes = [1, 32], strides = [1, 1]} : vector<6x32xf32> to vector<1x32xf32>
    %6 = vector.extract_strided_slice %1 {offsets = [4, 0], sizes = [1, 32], strides = [1, 1]} : vector<6x32xf32> to vector<1x32xf32>
    %7 = vector.extract_strided_slice %1 {offsets = [5, 0], sizes = [1, 32], strides = [1, 1]} : vector<6x32xf32> to vector<1x32xf32>
    %8 = tpu.iota {dimensions = array<i32: 0>} : vector<64x16xi32>
    %9 = tpu.iota {dimensions = array<i32: 1>} : vector<64x16xi32>
    %c1_i32 = arith.constant 1 : i32
    %10 = vector.broadcast %c1_i32 : i32 to vector<64x16xi32>
    %11 = arith.andi %8, %10 : vector<64x16xi32>
    %c1_i32_3 = arith.constant 1 : i32
    %12 = vector.broadcast %c1_i32_3 : i32 to vector<64x16xi32>
    %13 = arith.andi %9, %12 : vector<64x16xi32>
    %14 = arith.cmpi eq, %11, %13 : vector<64x16xi32>
    %c0_4 = arith.constant 0 : index
    %c0_5 = arith.constant 0 : index
    %15 = vector.load %arg1[%c0_4, %c0_5] : memref<1x16xf32, #tpu.memory_space<vmem>>, vector<1x16xf32>
    %cst = arith.constant 5.000000e-01 : f32
    %16 = vector.broadcast %cst : f32 to vector<1x16xf32>
    %17 = arith.cmpf ogt, %15, %16 : vector<1x16xf32>
    %18 = vector.broadcast %17 : vector<1x16xi1> to vector<64x16xi1>
    %19 = arith.andi %14, %18 : vector<64x16xi1>
    %cst_6 = arith.constant 0.000000e+00 : f32
    %cst_7 = arith.constant -1.000000e+30 : f32
    %20 = vector.broadcast %cst_6 : f32 to vector<64x16xf32>
    %21 = vector.broadcast %cst_7 : f32 to vector<64x16xf32>
    %22 = arith.select %19, %20, %21 : vector<64x16xi1>, vector<64x16xf32>
    %23 = arith.truncf %0 : vector<16x32xf32> to vector<16x32xbf16>
    %c0_8 = arith.constant 0 : index
    %c0_9 = arith.constant 0 : index
    %24 = vector.load %arg2[%c0_8, %c0_9] : memref<32x96xbf16, #tpu.memory_space<vmem>>, vector<32x96xbf16>
    %cst_10 = arith.constant dense<0.000000e+00> : vector<16x96xf32>
    %25 = tpu.matmul %23, %24, %cst_10 {dimension_numbers = #tpu.dot_dimension_numbers<[1], [0], [0], [1], [0, 0, 1, 1], [], []>} : vector<16x32xbf16>, vector<32x96xbf16>, vector<16x96xf32> -> vector<16x96xf32>
    %c0_11 = arith.constant 0 : index
    %c0_12 = arith.constant 0 : index
    %26 = vector.load %arg3[%c0_11, %c0_12] : memref<1x96xf32, #tpu.memory_space<vmem>>, vector<1x96xf32>
    %27 = vector.broadcast %26 : vector<1x96xf32> to vector<16x96xf32>
    %28 = arith.addf %25, %27 : vector<16x96xf32>
    %29 = vector.extract_strided_slice %28 {offsets = [0, 0], sizes = [16, 32], strides = [1, 1]} : vector<16x96xf32> to vector<16x32xf32>
    %30 = vector.extract_strided_slice %28 {offsets = [0, 32], sizes = [16, 32], strides = [1, 1]} : vector<16x96xf32> to vector<16x32xf32>
    %31 = arith.truncf %30 : vector<16x32xf32> to vector<16x32xbf16>
    %32 = vector.extract_strided_slice %28 {offsets = [0, 64], sizes = [16, 32], strides = [1, 1]} : vector<16x96xf32> to vector<16x32xf32>
    %33 = arith.truncf %32 : vector<16x32xf32> to vector<16x32xbf16>
    %34 = tpu.iota {dimensions = array<i32: 1>} : vector<4x32xi32>
    %35 = tpu.iota {dimensions = array<i32: 0>} : vector<4x32xi32>
    %c8_i32 = arith.constant 8 : i32
    %36 = vector.broadcast %c8_i32 : i32 to vector<4x32xi32>
    %37 = arith.muli %35, %36 : vector<4x32xi32>
    %38 = arith.cmpi sge, %34, %37 : vector<4x32xi32>
    %c1_i32_13 = arith.constant 1 : i32
    %39 = vector.broadcast %c1_i32_13 : i32 to vector<4x32xi32>
    %40 = arith.addi %35, %39 : vector<4x32xi32>
    %c8_i32_14 = arith.constant 8 : i32
    %41 = vector.broadcast %c8_i32_14 : i32 to vector<4x32xi32>
    %42 = arith.muli %40, %41 : vector<4x32xi32>
    %43 = arith.cmpi slt, %34, %42 : vector<4x32xi32>
    %44 = arith.andi %38, %43 : vector<4x32xi1>
    %45 = vector.shape_cast %44 : vector<4x32xi1> to vector<4x1x32xi1>
    %46 = vector.shape_cast %29 : vector<16x32xf32> to vector<1x16x32xf32>
    %cst_15 = arith.constant 0.000000e+00 : f32
    %47 = vector.shape_cast %45 : vector<4x1x32xi1> to vector<4x1x32xi1>
    %48 = vector.broadcast %47 : vector<4x1x32xi1> to vector<4x16x32xi1>
    %49 = vector.shape_cast %46 : vector<1x16x32xf32> to vector<1x16x32xf32>
    %50 = vector.broadcast %49 : vector<1x16x32xf32> to vector<4x16x32xf32>
    %51 = vector.broadcast %cst_15 : f32 to vector<4x16x32xf32>
    %52 = arith.select %48, %50, %51 : vector<4x16x32xi1>, vector<4x16x32xf32>
    %53 = vector.shape_cast %52 : vector<4x16x32xf32> to vector<64x32xf32>
    %54 = arith.truncf %53 : vector<64x32xf32> to vector<64x32xbf16>
    %cst_16 = arith.constant dense<0.000000e+00> : vector<64x16xf32>
    %55 = tpu.matmul %54, %31, %cst_16 {dimension_numbers = #tpu.dot_dimension_numbers<[1], [1], [0], [0], [0, 0, 1, 0], [], []>} : vector<64x32xbf16>, vector<16x32xbf16>, vector<64x16xf32> -> vector<64x16xf32>
    %cst_17 = arith.constant 0.353553385 : f32
    %56 = vector.broadcast %cst_17 : f32 to vector<64x16xf32>
    %57 = arith.mulf %55, %56 : vector<64x16xf32>
    %58 = arith.addf %57, %22 : vector<64x16xf32>
    %cst_18 = arith.constant dense<0xFF800000> : vector<64xf32>
    %59 = vector.multi_reduction <maximumf>, %58, %cst_18 [1] : vector<64x16xf32> to vector<64xf32>
    %60 = vector.shape_cast %59 : vector<64xf32> to vector<64x1xf32>
    %61 = vector.broadcast %60 : vector<64x1xf32> to vector<64x16xf32>
    %62 = arith.subf %58, %61 : vector<64x16xf32>
    %63 = math.exp %62 : vector<64x16xf32>
    %cst_19 = arith.constant dense<0.000000e+00> : vector<64xf32>
    %64 = vector.multi_reduction <add>, %63, %cst_19 [1] : vector<64x16xf32> to vector<64xf32>
    %65 = vector.shape_cast %64 : vector<64xf32> to vector<64x1xf32>
    %66 = tpu.reciprocal %65 {approx = true} : vector<64x1xf32> -> vector<64x1xf32>
    %67 = vector.broadcast %66 : vector<64x1xf32> to vector<64x16xf32>
    %68 = arith.mulf %63, %67 : vector<64x16xf32>
    %69 = arith.truncf %68 : vector<64x16xf32> to vector<64x16xbf16>
    %cst_20 = arith.constant dense<0.000000e+00> : vector<64x32xf32>
    %70 = tpu.matmul %69, %33, %cst_20 {dimension_numbers = #tpu.dot_dimension_numbers<[1], [0], [0], [1], [0, 0, 1, 1], [], []>} : vector<64x16xbf16>, vector<16x32xbf16>, vector<64x32xf32> -> vector<64x32xf32>
    %71 = vector.shape_cast %70 : vector<64x32xf32> to vector<4x16x32xf32>
    %cst_21 = arith.constant 0.000000e+00 : f32
    %72 = vector.shape_cast %45 : vector<4x1x32xi1> to vector<4x1x32xi1>
    %73 = vector.broadcast %72 : vector<4x1x32xi1> to vector<4x16x32xi1>
    %74 = vector.broadcast %cst_21 : f32 to vector<4x16x32xf32>
    %75 = arith.select %73, %71, %74 : vector<4x16x32xi1>, vector<4x16x32xf32>
    %cst_22 = arith.constant dense<0.000000e+00> : vector<16x32xf32>
    %76 = vector.multi_reduction <add>, %75, %cst_22 [0] : vector<4x16x32xf32> to vector<16x32xf32>
    %77 = arith.truncf %76 : vector<16x32xf32> to vector<16x32xbf16>
    %c0_23 = arith.constant 0 : index
    %c0_24 = arith.constant 0 : index
    %78 = vector.load %arg4[%c0_23, %c0_24] : memref<32x32xbf16, #tpu.memory_space<vmem>>, vector<32x32xbf16>
    %cst_25 = arith.constant dense<0.000000e+00> : vector<16x32xf32>
    %79 = tpu.matmul %77, %78, %cst_25 {dimension_numbers = #tpu.dot_dimension_numbers<[1], [0], [0], [1], [0, 0, 1, 1], [], []>} : vector<16x32xbf16>, vector<32x32xbf16>, vector<16x32xf32> -> vector<16x32xf32>
    %80 = vector.broadcast %2 : vector<1x32xf32> to vector<16x32xf32>
    %81 = arith.addf %79, %80 : vector<16x32xf32>
    %82 = arith.addf %0, %81 : vector<16x32xf32>
    %cst_26 = arith.constant dense<0.000000e+00> : vector<16xf32>
    %83 = vector.multi_reduction <add>, %82, %cst_26 [1] : vector<16x32xf32> to vector<16xf32>
    %84 = vector.shape_cast %83 : vector<16xf32> to vector<16x1xf32>
    %cst_27 = arith.constant 3.200000e+01 : f32
    %85 = vector.broadcast %cst_27 : f32 to vector<16x1xf32>
    %86 = arith.divf %84, %85 : vector<16x1xf32>
    %87 = vector.broadcast %86 : vector<16x1xf32> to vector<16x32xf32>
    %88 = arith.subf %82, %87 : vector<16x32xf32>
    %89 = arith.mulf %88, %88 : vector<16x32xf32>
    %cst_28 = arith.constant dense<0.000000e+00> : vector<16xf32>
    %90 = vector.multi_reduction <add>, %89, %cst_28 [1] : vector<16x32xf32> to vector<16xf32>
    %91 = vector.shape_cast %90 : vector<16xf32> to vector<16x1xf32>
    %cst_29 = arith.constant 3.200000e+01 : f32
    %92 = vector.broadcast %cst_29 : f32 to vector<16x1xf32>
    %93 = arith.divf %91, %92 : vector<16x1xf32>
    %94 = vector.broadcast %86 : vector<16x1xf32> to vector<16x32xf32>
    %95 = arith.subf %82, %94 : vector<16x32xf32>
    %cst_30 = arith.constant 9.99999996E-13 : f32
    %96 = vector.broadcast %cst_30 : f32 to vector<16x1xf32>
    %97 = arith.addf %93, %96 : vector<16x1xf32>
    %98 = math.rsqrt %97 : vector<16x1xf32>
    %99 = vector.broadcast %98 : vector<16x1xf32> to vector<16x32xf32>
    %100 = arith.mulf %95, %99 : vector<16x32xf32>
    %101 = vector.broadcast %3 : vector<1x32xf32> to vector<16x32xf32>
    %102 = arith.mulf %100, %101 : vector<16x32xf32>
    %103 = vector.broadcast %4 : vector<1x32xf32> to vector<16x32xf32>
    %104 = arith.addf %102, %103 : vector<16x32xf32>
    %105 = arith.truncf %104 : vector<16x32xf32> to vector<16x32xbf16>
    %c0_31 = arith.constant 0 : index
    %c0_32 = arith.constant 0 : index
    %106 = vector.load %arg5[%c0_31, %c0_32] : memref<32x128xbf16, #tpu.memory_space<vmem>>, vector<32x128xbf16>
    %cst_33 = arith.constant dense<0.000000e+00> : vector<16x128xf32>
    %107 = tpu.matmul %105, %106, %cst_33 {dimension_numbers = #tpu.dot_dimension_numbers<[1], [0], [0], [1], [0, 0, 1, 1], [], []>} : vector<16x32xbf16>, vector<32x128xbf16>, vector<16x128xf32> -> vector<16x128xf32>
    %c0_34 = arith.constant 0 : index
    %c0_35 = arith.constant 0 : index
    %108 = vector.load %arg6[%c0_34, %c0_35] : memref<1x128xf32, #tpu.memory_space<vmem>>, vector<1x128xf32>
    %109 = vector.broadcast %108 : vector<1x128xf32> to vector<16x128xf32>
    %110 = arith.addf %107, %109 : vector<16x128xf32>
    %cst_36 = arith.constant 5.000000e-01 : f32
    %111 = vector.broadcast %cst_36 : f32 to vector<16x128xf32>
    %112 = arith.mulf %111, %110 : vector<16x128xf32>
    %cst_37 = arith.constant 0.707106769 : f32
    %113 = vector.broadcast %cst_37 : f32 to vector<16x128xf32>
    %114 = arith.mulf %110, %113 : vector<16x128xf32>
    %115 = math.erf %114 : vector<16x128xf32>
    %cst_38 = arith.constant 1.000000e+00 : f32
    %116 = vector.broadcast %cst_38 : f32 to vector<16x128xf32>
    %117 = arith.addf %116, %115 : vector<16x128xf32>
    %118 = arith.mulf %112, %117 : vector<16x128xf32>
    %119 = arith.truncf %118 : vector<16x128xf32> to vector<16x128xbf16>
    %c0_39 = arith.constant 0 : index
    %c0_40 = arith.constant 0 : index
    %120 = vector.load %arg7[%c0_39, %c0_40] : memref<128x32xbf16, #tpu.memory_space<vmem>>, vector<128x32xbf16>
    %cst_41 = arith.constant dense<0.000000e+00> : vector<16x32xf32>
    %121 = tpu.matmul %119, %120, %cst_41 {dimension_numbers = #tpu.dot_dimension_numbers<[1], [0], [0], [1], [0, 0, 1, 1], [], []>} : vector<16x128xbf16>, vector<128x32xbf16>, vector<16x32xf32> -> vector<16x32xf32>
    %122 = vector.broadcast %5 : vector<1x32xf32> to vector<16x32xf32>
    %123 = arith.addf %121, %122 : vector<16x32xf32>
    %124 = arith.addf %104, %123 : vector<16x32xf32>
    %cst_42 = arith.constant dense<0.000000e+00> : vector<16xf32>
    %125 = vector.multi_reduction <add>, %124, %cst_42 [1] : vector<16x32xf32> to vector<16xf32>
    %126 = vector.shape_cast %125 : vector<16xf32> to vector<16x1xf32>
    %cst_43 = arith.constant 3.200000e+01 : f32
    %127 = vector.broadcast %cst_43 : f32 to vector<16x1xf32>
    %128 = arith.divf %126, %127 : vector<16x1xf32>
    %129 = vector.broadcast %128 : vector<16x1xf32> to vector<16x32xf32>
    %130 = arith.subf %124, %129 : vector<16x32xf32>
    %131 = arith.mulf %130, %130 : vector<16x32xf32>
    %cst_44 = arith.constant dense<0.000000e+00> : vector<16xf32>
    %132 = vector.multi_reduction <add>, %131, %cst_44 [1] : vector<16x32xf32> to vector<16xf32>
    %133 = vector.shape_cast %132 : vector<16xf32> to vector<16x1xf32>
    %cst_45 = arith.constant 3.200000e+01 : f32
    %134 = vector.broadcast %cst_45 : f32 to vector<16x1xf32>
    %135 = arith.divf %133, %134 : vector<16x1xf32>
    %136 = vector.broadcast %128 : vector<16x1xf32> to vector<16x32xf32>
    %137 = arith.subf %124, %136 : vector<16x32xf32>
    %cst_46 = arith.constant 9.99999996E-13 : f32
    %138 = vector.broadcast %cst_46 : f32 to vector<16x1xf32>
    %139 = arith.addf %135, %138 : vector<16x1xf32>
    %140 = math.rsqrt %139 : vector<16x1xf32>
    %141 = vector.broadcast %140 : vector<16x1xf32> to vector<16x32xf32>
    %142 = arith.mulf %137, %141 : vector<16x32xf32>
    %143 = vector.broadcast %6 : vector<1x32xf32> to vector<16x32xf32>
    %144 = arith.mulf %142, %143 : vector<16x32xf32>
    %145 = vector.broadcast %7 : vector<1x32xf32> to vector<16x32xf32>
    %146 = arith.addf %144, %145 : vector<16x32xf32>
    %c0_47 = arith.constant 0 : index
    %c0_48 = arith.constant 0 : index
    %147 = vector.load %arg9[%c0_47, %c0_48] : memref<16x32xf32, #tpu.memory_space<vmem>>, vector<16x32xf32>
    tpu.vector_store %arg9[%c0_47, %c0_48], %146 {strides = array<i32>} : memref<16x32xf32, #tpu.memory_space<vmem>>, vector<16x32xf32>,
    return
  }
}

</mosaic_0001>

<llo_original>
// kernel: bert_layer.1
$region0: #{bert_layer.1}
  #allocation0 [shape = 'u32[]', space=smem, size = 0x4, offset = 0x4, fixed_abs, tag = 'smem constant byte address 0x4 - core index']
  #allocation1 [shape = 'u32[144,128]{1,0:T(1,128)}', space=vmem, size = 0x12000, scoped, tag = 'internal scratch']
  %s0 = inlined_call_operand.vmem [shape: f32[16,32], index: 0, kind: input, shape index: {}]
  %s1 = inlined_call_operand.vmem [shape: f32[1,16], index: 1, kind: input, shape index: {}]
  %s2 = inlined_call_operand.vmem [shape: bf16[32,96], index: 2, kind: input, shape index: {}]
  %s3 = inlined_call_operand.vmem [shape: f32[1,96], index: 3, kind: input, shape index: {}]
  %s4 = inlined_call_operand.vmem [shape: bf16[32,32], index: 4, kind: input, shape index: {}]
  %s5 = inlined_call_operand.vmem [shape: bf16[32,128], index: 5, kind: input, shape index: {}]
  %s6 = inlined_call_operand.vmem [shape: f32[1,128], index: 6, kind: input, shape index: {}]
  %s7 = inlined_call_operand.vmem [shape: bf16[128,32], index: 7, kind: input, shape index: {}]
  %s8 = inlined_call_operand.vmem [shape: f32[6,32], index: 8, kind: input, shape index: {}]
  %s9 = inlined_call_operand.hbm [shape: f32[16,32], index: 9, kind: output, shape index: {}]
  %s10 = sld [smem:[#allocation0]]
  $region46: #{bert_layer.1} parent=0
    _
  %s12 = ssub.s32 1, %s10
  %s13 = scalar_select 0, %s12, %s10
  $region1: #{bert_layer.1} parent=0
    #allocation2 [shape = 'u8[8192]{0}', space=vmem, size = 0x2000, scoped, tag = 'output window, operand 0, single buffered']
    #allocation3 [shape = 's32[1]{0}', space=sflag, size = 0x4, scoped, tag = 'scoped memory for bert_layer.1']
    %14 = vsyncpa [#allocation3], 0
    // Predicated region
    $region2: #{bert_layer.1} parent=1 // pred_check
      _
    $region3: #{bert_layer.1} parent=1 // pred_check_branch
      %16 = sbr.rel (0) target = $region5
    $region4: #{bert_layer.1} parent=1 // pred_region
      _
    $region5: #{bert_layer.1} parent=1 // pred_fallthru
      _
    // Predicated region
    $region6: #{bert_layer.1} parent=1 // pred_check
      _
    $region7: #{bert_layer.1} parent=1 // pred_check_branch
      %18 = sbr.rel (0) target = $region9
    $region8: #{bert_layer.1} parent=1 // pred_region
      _
    $region9: #{bert_layer.1} parent=1 // pred_fallthru
      _
    // Predicated region
    $region10: #{bert_layer.1} parent=1 // pred_check
      _
    $region11: #{bert_layer.1} parent=1 // pred_check_branch
      %20 = sbr.rel (0) target = $region13
    $region12: #{bert_layer.1} parent=1 // pred_region
      _
    $region13: #{bert_layer.1} parent=1 // pred_fallthru
      _
    // Predicated region
    $region14: #{bert_layer.1} parent=1 // pred_check
      _
    $region15: #{bert_layer.1} parent=1 // pred_check_branch
      %22 = sbr.rel (0) target = $region17
    $region16: #{bert_layer.1} parent=1 // pred_region
      _
    $region17: #{bert_layer.1} parent=1 // pred_fallthru
      _
    // Predicated region
    $region18: #{bert_layer.1} parent=1 // pred_check
      _
    $region19: #{bert_layer.1} parent=1 // pred_check_branch
      %24 = sbr.rel (0) target = $region21
    $region20: #{bert_layer.1} parent=1 // pred_region
      _
    $region21: #{bert_layer.1} parent=1 // pred_fallthru
      _
    // Predicated region
    $region22: #{bert_layer.1} parent=1 // pred_check
      _
    $region23: #{bert_layer.1} parent=1 // pred_check_branch
      %26 = sbr.rel (0) target = $region25
    $region24: #{bert_layer.1} parent=1 // pred_region
      _
    $region25: #{bert_layer.1} parent=1 // pred_fallthru
      _
    // Predicated region
    $region26: #{bert_layer.1} parent=1 // pred_check
      _
    $region27: #{bert_layer.1} parent=1 // pred_check_branch
      %28 = sbr.rel (0) target = $region29
    $region28: #{bert_layer.1} parent=1 // pred_region
      _
    $region29: #{bert_layer.1} parent=1 // pred_fallthru
      _
    // Predicated region
    $region30: #{bert_layer.1} parent=1 // pred_check
      _
    $region31: #{bert_layer.1} parent=1 // pred_check_branch
      %30 = sbr.rel (0) target = $region33
    $region32: #{bert_layer.1} parent=1 // pred_region
      _
    $region33: #{bert_layer.1} parent=1 // pred_fallthru
      _
    // Predicated region
    $region34: #{bert_layer.1} parent=1 // pred_check
      _
    $region35: #{bert_layer.1} parent=1 // pred_check_branch
      %32 = sbr.rel (0) target = $region37
    $region36: #{bert_layer.1} parent=1 // pred_region
      _
    $region37: #{bert_layer.1} parent=1 // pred_fallthru
      _
    %v34 = vld [vmem:[%s0] sm:$0xff]
    %v35 = vld [vmem:[%s0 + $0x8] sm:$0xff]
    %v36 = vld [vmem:[%s8] sm:$0x3f]
    %v37 = vlaneseq
    %v38 = vshrl.u32 %v37, 7
    %v39 = vadd.s32 %v38, 8
    %v40 = vadd.s32 %v38, 16
    %v41 = vadd.s32 %v38, 24
    %v42 = vadd.s32 %v38, 32
    %v43 = vadd.s32 %v38, 40
    %v44 = vadd.s32 %v38, 48
    %v45 = vadd.s32 %v38, 56
    %v46 = vlaneseq
    %v47 = vand.u32 %v46, 127
    %v48 = vand.u32 %v38, 1
    %v49 = vand.u32 %v39, 1
    %v50 = vand.u32 %v40, 1
    %v51 = vand.u32 %v41, 1
    %v52 = vand.u32 %v42, 1
    %v53 = vand.u32 %v43, 1
    %v54 = vand.u32 %v44, 1
    %v55 = vand.u32 %v45, 1
    %v56 = vand.u32 %v47, 1
    %vm57 = vcmp.eq.s32.totalorder %v48, %v56
    %vm58 = vcmp.eq.s32.totalorder %v49, %v56
    %vm59 = vcmp.eq.s32.totalorder %v50, %v56
    %vm60 = vcmp.eq.s32.totalorder %v51, %v56
    %vm61 = vcmp.eq.s32.totalorder %v52, %v56
    %vm62 = vcmp.eq.s32.totalorder %v53, %v56
    %vm63 = vcmp.eq.s32.totalorder %v54, %v56
    %vm64 = vcmp.eq.s32.totalorder %v55, %v56
    %v65 = vld [vmem:[%s1] sm:$0x1]
    %vm66 = vcmp.gt.f32.partialorder %v65, 0.5
    %v67 = vsel %vm66, 1, 0
    %v68 = vlaneseq
    %v69 = vshrl.u32 %v68, 7
    %v70 = vsub.s32 0, %v69
    %v71 = vrot.slane %v67, %v70
    %vm72 = vcmp.eq.s32.totalorder %v71, 1
    %vm73 = vmand %vm57, %vm72
    %vm74 = vmand %vm58, %vm72
    %vm75 = vmand %vm59, %vm72
    %vm76 = vmand %vm60, %vm72
    %vm77 = vmand %vm61, %vm72
    %vm78 = vmand %vm62, %vm72
    %vm79 = vmand %vm63, %vm72
    %vm80 = vmand %vm64, %vm72
    %v81 = vsel %vm73, 0.0, -1e+30
    %v82 = vsel %vm74, 0.0, -1e+30
    %v83 = vsel %vm75, 0.0, -1e+30
    %v84 = vsel %vm76, 0.0, -1e+30
    %v85 = vsel %vm77, 0.0, -1e+30
    %v86 = vsel %vm78, 0.0, -1e+30
    %v87 = vsel %vm79, 0.0, -1e+30
    %v88 = vsel %vm80, 0.0, -1e+30
    %v89 = vpack.c.bf16 %v35, %v34
    %v90 = vld [vmem:[%s2] sm:$0xf]
    %v91 = vld [vmem:[%s2 + $0x4] sm:$0xf]
    %v92 = vld [vmem:[%s2 + $0x8] sm:$0xf]
    %v93 = vld [vmem:[%s2 + $0xc] sm:$0xf]
    %v94 = vld [vmem:[%s3] sm:$0x1]
    %v96 = vlaneseq
    %v97 = vshrl.u32 %v96, 7
    %v98 = vsub.s32 0, %v97
    %v99 = vrot.slane %v94, %v98
    %v105 = vunpack.c.l.b16 %v90
    %v106 = vunpack.c.l.b16 %v91
    %v107 = vunpack.c.l.b16 %v92
    %v108 = vunpack.c.l.b16 %v93
    %v109 = vpack.c.b16 %v106, %v105
    %v110 = vpack.c.b16 %v108, %v107
    %vm113 = vcmask 261120
    %v115 = vsel %vm113, %v89, 0
    %117 = vmatprep.subr.bf16.mxu0 0
    %118 = vmatpush1.bf16.msra.mxu0 %v109
    %119 = vmatprep.subr.bf16.mxu0 0
    %120 = vmatpush1.bf16.msra.mxu0 %v110
    %121 = vmatprep.subr.bf16.mxu0 0
    %122 = vmatpush1.bf16.msra.mxu0 0
    %123 = vmatprep.subr.bf16.mxu0 0
    %124 = vmatpush1.bf16.msra.mxu0 0
    %125 = vmatprep.subr.bf16.mxu0 0
    %126 = vmatpush1.bf16.msra.mxu0 0
    %127 = vmatprep.subr.bf16.mxu0 0
    %128 = vmatpush1.bf16.msra.mxu0 0
    %129 = vmatprep.subr.bf16.mxu0 0
    %130 = vmatpush1.bf16.msra.mxu0 0
    %131 = vmatprep.subr.bf16.mxu0 0
    %132 = vmatpush1.bf16.msra.mxu0 0
    %133 = vmatprep.subr.bf16.mxu0 0
    %134 = vmatpush1.bf16.msra.mxu0 0
    %135 = vmatprep.subr.bf16.mxu0 0
    %136 = vmatpush1.bf16.msra.mxu0 0
    %137 = vmatprep.subr.bf16.mxu0 0
    %138 = vmatpush1.bf16.msra.mxu0 0
    %139 = vmatprep.subr.bf16.mxu0 0
    %140 = vmatpush1.bf16.msra.mxu0 0
    %141 = vmatprep.subr.bf16.mxu0 0
    %142 = vmatpush1.bf16.msra.mxu0 0
    %143 = vmatprep.subr.bf16.mxu0 0
    %144 = vmatpush1.bf16.msra.mxu0 0
    %145 = vmatprep.subr.bf16.mxu0 0
    %146 = vmatpush1.bf16.msra.mxu0 0
    %147 = vmatprep.subr.bf16.mxu0 0
    %148 = vmatpush1.bf16.msra.mxu0 0
    %149 = vmatprep.mubr.bf16.mxu0 0
    %150 = vmatmul.mubr.bf16.gmra.mrb[0].mxu0 %v115
    %v151 = vpop.f32.mrb[0].mxu0
    %v152 = vadd.f32 %v99, %v151
    %v153 = vpop.f32.mrb[0].mxu0
    %v154 = vpop.f32.mrb[0].mxu0
    %v155 = vadd.f32 %v99, %v154
    %v156 = vpop.f32.mrb[0].mxu0
    %157 = vdwg.mxu0
    %v158 = vpack.c.bf16 %v155, %v152
    %v159 = vmul.u32 %v38, 8
    %vm160 = vcmp.ge.s32.totalorder %v47, %v159
    %v161 = vadd.s32 %v38, 1
    %v162 = vmul.u32 %v161, 8
    %vm163 = vcmp.lt.s32.totalorder %v47, %v162
    %vm164 = vmand %vm160, %vm163
    %v165 = vsel %vm164, 1, 0
    %v167 = vunpack.c.l.s4 1966171168
    %v168 = vunpack.c.0.s8 %v167
    %v169 = vlaneseq
    %v170 = vshrl.u32 %v169, 7
    %v171 = vsub.s32 %v168, %v170
    %v172 = vrot.slane %v165, %v171
    %v173 = vcombine.high %v172, %v172
    %v175 = vunpack.c.l.s4 1966171168
    %v176 = vunpack.c.0.s8 %v175
    %v177 = vlaneseq
    %v178 = vshrl.u32 %v177, 7
    %v179 = vsub.s32 %v176, %v178
    %v180 = vrot.slane %v172, %v179
    %v182 = vunpack.c.l.s4 1966171168
    %v183 = vunpack.c.0.s8 %v182
    %v184 = vlaneseq
    %v185 = vshrl.u32 %v184, 7
    %v186 = vsub.s32 %v183, %v185
    %v187 = vrot.slane %v173, %v186
    %v188 = vcombine.high %v180, %v180
    %v189 = vcombine.high %v187, %v187
    %vm190 = vcmp.ne.s32.totalorder %v180, 0
    %vm191 = vcmp.ne.s32.totalorder %v187, 0
    %vm192 = vcmp.ne.s32.totalorder %v188, 0
    %vm193 = vcmp.ne.s32.totalorder %v189, 0
    %v194 = vsel %vm190, 1, 0
    %v195 = vsel %vm191, 1, 0
    %v196 = vsel %vm192, 1, 0
    %v197 = vsel %vm193, 1, 0
    %v198 = vlaneseq
    %v199 = vshrl.u32 %v198, 7
    %v200 = vsub.s32 0, %v199
    %v201 = vrot.slane %v194, %v200
    %v202 = vlaneseq
    %v203 = vshrl.u32 %v202, 7
    %v204 = vsub.s32 0, %v203
    %v205 = vrot.slane %v195, %v204
    %v206 = vlaneseq
    %v207 = vshrl.u32 %v206, 7
    %v208 = vsub.s32 0, %v207
    %v209 = vrot.slane %v196, %v208
    %v210 = vlaneseq
    %v211 = vshrl.u32 %v210, 7
    %v212 = vsub.s32 0, %v211
    %v213 = vrot.slane %v197, %v212
    %vm214 = vcmp.eq.s32.totalorder %v201, 1
    %vm215 = vcmp.eq.s32.totalorder %v205, 1
    %vm216 = vcmp.eq.s32.totalorder %v209, 1
    %vm217 = vcmp.eq.s32.totalorder %v213, 1
    %v218 = vsel %vm214, %v152, 0.0
    %v219 = vsel %vm214, %v155, 0.0
    %v220 = vsel %vm215, %v152, 0.0
    %v221 = vsel %vm215, %v155, 0.0
    %v222 = vsel %vm216, %v152, 0.0
    %v223 = vsel %vm216, %v155, 0.0
    %v224 = vsel %vm217, %v152, 0.0
    %v225 = vsel %vm217, %v155, 0.0
    %v226 = vpack.c.bf16 %v219, %v218
    %v227 = vpack.c.bf16 %v221, %v220
    %v228 = vpack.c.bf16 %v223, %v222
    %v229 = vpack.c.bf16 %v225, %v224
    %231 = vrot.lane.b32.xlu0 %v158, 96
    %v232 = vpop.permute.xlu0 %231
    %v234 = vsel %vm113, %v226, 0
    %v237 = vsel %vm113, %v227, 0
    %v240 = vsel %vm113, %v228, 0
    %v243 = vsel %vm113, %v229, 0
    %v246 = vsel %vm113, %v232, 0
    %248 = vmatprep.subr.bf16.mxu0 0
    %249 = vmatpush1.bf16.xpose.msra.mxu0 %v246
    %250 = vmatprep.subr.bf16.mxu0 0
    %251 = vmatpush1.bf16.xpose.msra.mxu0 0
    %252 = vmatprep.subr.bf16.mxu0 0
    %253 = vmatpush1.bf16.xpose.msra.mxu0 0
    %254 = vmatprep.subr.bf16.mxu0 0
    %255 = vmatpush1.bf16.xpose.msra.mxu0 0
    %256 = vmatprep.subr.bf16.mxu0 0
    %257 = vmatpush1.bf16.xpose.msra.mxu0 0
    %258 = vmatprep.subr.bf16.mxu0 0
    %259 = vmatpush1.bf16.xpose.msra.mxu0 0
    %260 = vmatprep.subr.bf16.mxu0 0
    %261 = vmatpush1.bf16.xpose.msra.mxu0 0
    %262 = vmatprep.subr.bf16.mxu0 0
    %263 = vmatpush1.bf16.xpose.msra.mxu0 0
    %264 = vmatprep.subr.bf16.mxu0 0
    %265 = vmatpush1.bf16.xpose.msra.mxu0 0
    %266 = vmatprep.subr.bf16.mxu0 0
    %267 = vmatpush1.bf16.xpose.msra.mxu0 0
    %268 = vmatprep.subr.bf16.mxu0 0
    %269 = vmatpush1.bf16.xpose.msra.mxu0 0
    %270 = vmatprep.subr.bf16.mxu0 0
    %271 = vmatpush1.bf16.xpose.msra.mxu0 0
    %272 = vmatprep.subr.bf16.mxu0 0
    %273 = vmatpush1.bf16.xpose.msra.mxu0 0
    %274 = vmatprep.subr.bf16.mxu0 0
    %275 = vmatpush1.bf16.xpose.msra.mxu0 0
    %276 = vmatprep.subr.bf16.mxu0 0
    %277 = vmatpush1.bf16.xpose.msra.mxu0 0
    %278 = vmatprep.subr.bf16.mxu0 0
    %279 = vmatpush1.bf16.xpose.msra.mxu0 0
    %280 = vmatprep.mubr.bf16.mxu0 0
    %281 = vmatmul.mubr.bf16.gmra.mrb[0].mxu0 %v234
    %v282 = vpop.f32.mrb[0].mxu0
    %v283 = vadd.f32 0.0, %v282
    %v284 = vpop.f32.mrb[0].mxu0
    %v285 = vpop.f32.mrb[0].mxu0
    %v286 = vadd.f32 0.0, %v285
    %v287 = vpop.f32.mrb[0].mxu0
    %288 = vmatprep.mubr.bf16.mxu0 0
    %289 = vmatmul.mubr.bf16.gmra.mrb[0].mxu0 %v237
    %v290 = vpop.f32.mrb[0].mxu0
    %v291 = vadd.f32 0.0, %v290
    %v292 = vpop.f32.mrb[0].mxu0
    %v293 = vpop.f32.mrb[0].mxu0
    %v294 = vadd.f32 0.0, %v293
    %v295 = vpop.f32.mrb[0].mxu0
    %296 = vmatprep.mubr.bf16.mxu0 0
    %297 = vmatmul.mubr.bf16.gmra.mrb[0].mxu0 %v240
    %v298 = vpop.f32.mrb[0].mxu0
    %v299 = vadd.f32 0.0, %v298
    %v300 = vpop.f32.mrb[0].mxu0
    %v301 = vpop.f32.mrb[0].mxu0
    %v302 = vadd.f32 0.0, %v301
    %v303 = vpop.f32.mrb[0].mxu0
    %304 = vmatprep.mubr.bf16.mxu0 0
    %305 = vmatmul.mubr.bf16.gmra.mrb[0].mxu0 %v243
    %v306 = vpop.f32.mrb[0].mxu0
    %v307 = vadd.f32 0.0, %v306
    %v308 = vpop.f32.mrb[0].mxu0
    %v309 = vpop.f32.mrb[0].mxu0
    %v310 = vadd.f32 0.0, %v309
    %v311 = vpop.f32.mrb[0].mxu0
    %312 = vdwg.mxu0
    %v313 = vmul.f32 %v283, 0.35355338
    %v314 = vmul.f32 %v286, 0.35355338
    %v315 = vmul.f32 %v291, 0.35355338
    %v316 = vmul.f32 %v294, 0.35355338
    %v317 = vmul.f32 %v299, 0.35355338
    %v318 = vmul.f32 %v302, 0.35355338
    %v319 = vmul.f32 %v307, 0.35355338
    %v320 = vmul.f32 %v310, 0.35355338
    %v321 = vadd.f32 %v313, %v81
    %v322 = vadd.f32 %v314, %v82
    %v323 = vadd.f32 %v315, %v83
    %v324 = vadd.f32 %v316, %v84
    %v325 = vadd.f32 %v317, %v85
    %v326 = vadd.f32 %v318, %v86
    %v327 = vadd.f32 %v319, %v87
    %v328 = vadd.f32 %v320, %v88
    %vm329 = vcmask 130048
    %v330 = vsel %vm329, %v321, -inf
    %331 = vmax.xlane.f32.xlu0 %v330
    %v332 = vpop.xlane.xlu0 %331
    %v333 = vsel %vm329, %v322, -inf
    %334 = vmax.xlane.f32.xlu0 %v333
    %v335 = vpop.xlane.xlu0 %334
    %v336 = vsel %vm329, %v323, -inf
    %337 = vmax.xlane.f32.xlu0 %v336
    %v338 = vpop.xlane.xlu0 %337
    %v339 = vsel %vm329, %v324, -inf
    %340 = vmax.xlane.f32.xlu0 %v339
    %v341 = vpop.xlane.xlu0 %340
    %v342 = vsel %vm329, %v325, -inf
    %343 = vmax.xlane.f32.xlu0 %v342
    %v344 = vpop.xlane.xlu0 %343
    %v345 = vsel %vm329, %v326, -inf
    %346 = vmax.xlane.f32.xlu0 %v345
    %v347 = vpop.xlane.xlu0 %346
    %v348 = vsel %vm329, %v327, -inf
    %349 = vmax.xlane.f32.xlu0 %v348
    %v350 = vpop.xlane.xlu0 %349
    %v351 = vsel %vm329, %v328, -inf
    %352 = vmax.xlane.f32.xlu0 %v351
    %v353 = vpop.xlane.xlu0 %352
    %v354 = vsub.f32 %v321, %v332
    %v355 = vsub.f32 %v322, %v335
    %v356 = vsub.f32 %v323, %v338
    %v357 = vsub.f32 %v324, %v341
    %v358 = vsub.f32 %v325, %v344
    %v359 = vsub.f32 %v326, %v347
    %v360 = vsub.f32 %v327, %v350
    %v361 = vsub.f32 %v328, %v353
    %v362 = vmul.f32 %v354, 1.442695
    %v363 = vpow.pop %v362
    %v364 = vmul.f32 %v355, 1.442695
    %v365 = vpow.pop %v364
    %v366 = vmul.f32 %v356, 1.442695
    %v367 = vpow.pop %v366
    %v368 = vmul.f32 %v357, 1.442695
    %v369 = vpow.pop %v368
    %v370 = vmul.f32 %v358, 1.442695
    %v371 = vpow.pop %v370
    %v372 = vmul.f32 %v359, 1.442695
    %v373 = vpow.pop %v372
    %v374 = vmul.f32 %v360, 1.442695
    %v375 = vpow.pop %v374
    %v376 = vmul.f32 %v361, 1.442695
    %v377 = vpow.pop %v376
    %v378 = vsel %vm329, %v363, 0.0
    %379 = vadd.xlane.f32.xlu0 %v378
    %v380 = vpop.xlane.xlu0 %379
    %v381 = vsel %vm329, %v365, 0.0
    %382 = vadd.xlane.f32.xlu0 %v381
    %v383 = vpop.xlane.xlu0 %382
    %v384 = vsel %vm329, %v367, 0.0
    %385 = vadd.xlane.f32.xlu0 %v384
    %v386 = vpop.xlane.xlu0 %385
    %v387 = vsel %vm329, %v369, 0.0
    %388 = vadd.xlane.f32.xlu0 %v387
    %v389 = vpop.xlane.xlu0 %388
    %v390 = vsel %vm329, %v371, 0.0
    %391 = vadd.xlane.f32.xlu0 %v390
    %v392 = vpop.xlane.xlu0 %391
    %v393 = vsel %vm329, %v373, 0.0
    %394 = vadd.xlane.f32.xlu0 %v393
    %v395 = vpop.xlane.xlu0 %394
    %v396 = vsel %vm329, %v375, 0.0
    %397 = vadd.xlane.f32.xlu0 %v396
    %v398 = vpop.xlane.xlu0 %397
    %v399 = vsel %vm329, %v377, 0.0
    %400 = vadd.xlane.f32.xlu0 %v399
    %v401 = vpop.xlane.xlu0 %400
    %v402 = vrcp.pop %v380
    %v403 = vrcp.pop %v383
    %v404 = vrcp.pop %v386
    %v405 = vrcp.pop %v389
    %v406 = vrcp.pop %v392
    %v407 = vrcp.pop %v395
    %v408 = vrcp.pop %v398
    %v409 = vrcp.pop %v401
    %v410 = vmul.f32 %v363, %v402
    %v411 = vmul.f32 %v365, %v403
    %v412 = vmul.f32 %v367, %v404
    %v413 = vmul.f32 %v369, %v405
    %v414 = vmul.f32 %v371, %v406
    %v415 = vmul.f32 %v373, %v407
    %v416 = vmul.f32 %v375, %v408
    %v417 = vmul.f32 %v377, %v409
    %v418 = vpack.c.bf16 %v411, %v410
    %v419 = vpack.c.bf16 %v413, %v412
    %v420 = vpack.c.bf16 %v415, %v414
    %v421 = vpack.c.bf16 %v417, %v416
    %422 = vrot.lane.b32.xlu0 %v158, 64
    %v423 = vpop.permute.xlu0 %422
    %v426 = vsel %vm329, %v418, 0
    %v429 = vsel %vm329, %v419, 0
    %v432 = vsel %vm329, %v420, 0
    %v435 = vsel %vm329, %v421, 0
    %437 = vmatprep.subr.bf16.mxu0 0
    %438 = vmatpush1.bf16.msra.mxu0 %v423
    %439 = vmatprep.subr.bf16.mxu0 0
    %440 = vmatpush1.bf16.msra.mxu0 0
    %441 = vmatprep.subr.bf16.mxu0 0
    %442 = vmatpush1.bf16.msra.mxu0 0
    %443 = vmatprep.subr.bf16.mxu0 0
    %444 = vmatpush1.bf16.msra.mxu0 0
    %445 = vmatprep.subr.bf16.mxu0 0
    %446 = vmatpush1.bf16.msra.mxu0 0
    %447 = vmatprep.subr.bf16.mxu0 0
    %448 = vmatpush1.bf16.msra.mxu0 0
    %449 = vmatprep.subr.bf16.mxu0 0
    %450 = vmatpush1.bf16.msra.mxu0 0
    %451 = vmatprep.subr.bf16.mxu0 0
    %452 = vmatpush1.bf16.msra.mxu0 0
    %453 = vmatprep.subr.bf16.mxu0 0
    %454 = vmatpush1.bf16.msra.mxu0 0
    %455 = vmatprep.subr.bf16.mxu0 0
    %456 = vmatpush1.bf16.msra.mxu0 0
    %457 = vmatprep.subr.bf16.mxu0 0
    %458 = vmatpush1.bf16.msra.mxu0 0
    %459 = vmatprep.subr.bf16.mxu0 0
    %460 = vmatpush1.bf16.msra.mxu0 0
    %461 = vmatprep.subr.bf16.mxu0 0
    %462 = vmatpush1.bf16.msra.mxu0 0
    %463 = vmatprep.subr.bf16.mxu0 0
    %464 = vmatpush1.bf16.msra.mxu0 0
    %465 = vmatprep.subr.bf16.mxu0 0
    %466 = vmatpush1.bf16.msra.mxu0 0
    %467 = vmatprep.subr.bf16.mxu0 0
    %468 = vmatpush1.bf16.msra.mxu0 0
    %469 = vmatprep.mubr.bf16.mxu0 0
    %470 = vmatmul.mubr.bf16.gmra.mrb[0].mxu0 %v426
    %v471 = vpop.f32.mrb[0].mxu0
    %v472 = vadd.f32 0.0, %v471
    %v473 = vpop.f32.mrb[0].mxu0
    %v474 = vpop.f32.mrb[0].mxu0
    %v475 = vadd.f32 0.0, %v474
    %v476 = vpop.f32.mrb[0].mxu0
    %477 = vmatprep.mubr.bf16.mxu0 0
    %478 = vmatmul.mubr.bf16.gmra.mrb[0].mxu0 %v429
    %v479 = vpop.f32.mrb[0].mxu0
    %v480 = vadd.f32 0.0, %v479
    %v481 = vpop.f32.mrb[0].mxu0
    %v482 = vpop.f32.mrb[0].mxu0
    %v483 = vadd.f32 0.0, %v482
    %v484 = vpop.f32.mrb[0].mxu0
    %485 = vmatprep.mubr.bf16.mxu0 0
    %486 = vmatmul.mubr.bf16.gmra.mrb[0].mxu0 %v432
    %v487 = vpop.f32.mrb[0].mxu0
    %v488 = vadd.f32 0.0, %v487
    %v489 = vpop.f32.mrb[0].mxu0
    %v490 = vpop.f32.mrb[0].mxu0
    %v491 = vadd.f32 0.0, %v490
    %v492 = vpop.f32.mrb[0].mxu0
    %493 = vmatprep.mubr.bf16.mxu0 0
    %494 = vmatmul.mubr.bf16.gmra.mrb[0].mxu0 %v435
    %v495 = vpop.f32.mrb[0].mxu0
    %v496 = vadd.f32 0.0, %v495
    %v497 = vpop.f32.mrb[0].mxu0
    %v498 = vpop.f32.mrb[0].mxu0
    %v499 = vadd.f32 0.0, %v498
    %v500 = vpop.f32.mrb[0].mxu0
    %501 = vdwg.mxu0
    %v502 = vsel %vm214, %v472, 0.0
    %v503 = vsel %vm214, %v475, 0.0
    %v504 = vsel %vm215, %v480, 0.0
    %v505 = vsel %vm215, %v483, 0.0
    %v506 = vsel %vm216, %v488, 0.0
    %v507 = vsel %vm216, %v491, 0.0
    %v508 = vsel %vm217, %v496, 0.0
    %v509 = vsel %vm217, %v499, 0.0
    %v510 = vsel %vm113, %v502, 0.0
    %v511 = vsel %vm113, %v504, 0.0
    %v512 = vadd.f32 %v510, %v511
    %v513 = vsel %vm113, %v506, 0.0
    %v514 = vadd.f32 %v512, %v513
    %v515 = vsel %vm113, %v508, 0.0
    %v516 = vadd.f32 %v514, %v515
    %v517 = vsel %vm113, %v503, 0.0
    %v518 = vsel %vm113, %v505, 0.0
    %v519 = vadd.f32 %v517, %v518
    %v520 = vsel %vm113, %v507, 0.0
    %v521 = vadd.f32 %v519, %v520
    %v522 = vsel %vm113, %v509, 0.0
    %v523 = vadd.f32 %v521, %v522
    %v524 = vpack.c.bf16 %v523, %v516
    %v525 = vld [vmem:[%s4] sm:$0xf]
    %v526 = vld [vmem:[%s4 + $0x4] sm:$0xf]
    %v527 = vld [vmem:[%s4 + $0x8] sm:$0xf]
    %v528 = vld [vmem:[%s4 + $0xc] sm:$0xf]
    %v529 = vlaneseq
    %v530 = vshrl.u32 %v529, 7
    %v531 = vsub.s32 0, %v530
    %v532 = vrot.slane %v36, %v531
    %v537 = vunpack.c.l.b16 %v525
    %v538 = vunpack.c.l.b16 %v526
    %v539 = vunpack.c.l.b16 %v527
    %v540 = vunpack.c.l.b16 %v528
    %v541 = vpack.c.b16 %v538, %v537
    %v542 = vpack.c.b16 %v540, %v539
    %v546 = vsel %vm113, %v524, 0
    %548 = vmatprep.subr.bf16.mxu0 0
    %549 = vmatpush1.bf16.msra.mxu0 %v541
    %550 = vmatprep.subr.bf16.mxu0 0
    %551 = vmatpush1.bf16.msra.mxu0 %v542
    %552 = vmatprep.subr.bf16.mxu0 0
    %553 = vmatpush1.bf16.msra.mxu0 0
    %554 = vmatprep.subr.bf16.mxu0 0
    %555 = vmatpush1.bf16.msra.mxu0 0
    %556 = vmatprep.subr.bf16.mxu0 0
    %557 = vmatpush1.bf16.msra.mxu0 0
    %558 = vmatprep.subr.bf16.mxu0 0
    %559 = vmatpush1.bf16.msra.mxu0 0
    %560 = vmatprep.subr.bf16.mxu0 0
    %561 = vmatpush1.bf16.msra.mxu0 0
    %562 = vmatprep.subr.bf16.mxu0 0
    %563 = vmatpush1.bf16.msra.mxu0 0
    %564 = vmatprep.subr.bf16.mxu0 0
    %565 = vmatpush1.bf16.msra.mxu0 0
    %566 = vmatprep.subr.bf16.mxu0 0
    %567 = vmatpush1.bf16.msra.mxu0 0
    %568 = vmatprep.subr.bf16.mxu0 0
    %569 = vmatpush1.bf16.msra.mxu0 0
    %570 = vmatprep.subr.bf16.mxu0 0
    %571 = vmatpush1.bf16.msra.mxu0 0
    %572 = vmatprep.subr.bf16.mxu0 0
    %573 = vmatpush1.bf16.msra.mxu0 0
    %574 = vmatprep.subr.bf16.mxu0 0
    %575 = vmatpush1.bf16.msra.mxu0 0
    %576 = vmatprep.subr.bf16.mxu0 0
    %577 = vmatpush1.bf16.msra.mxu0 0
    %578 = vmatprep.subr.bf16.mxu0 0
    %579 = vmatpush1.bf16.msra.mxu0 0
    %580 = vmatprep.mubr.bf16.mxu0 0
    %581 = vmatmul.mubr.bf16.gmra.mrb[0].mxu0 %v546
    %v582 = vpop.f32.mrb[0].mxu0
    %v583 = vadd.f32 %v532, %v582
    %v584 = vpop.f32.mrb[0].mxu0
    %v585 = vpop.f32.mrb[0].mxu0
    %v586 = vadd.f32 %v532, %v585
    %v587 = vpop.f32.mrb[0].mxu0
    %588 = vdwg.mxu0
    %v589 = vadd.f32 %v34, %v583
    %v590 = vadd.f32 %v35, %v586
    %v591 = vsel %vm113, %v589, 0.0
    %592 = vadd.xlane.f32.xlu0 %v591
    %v593 = vpop.xlane.xlu0 %592
    %v594 = vsel %vm113, %v590, 0.0
    %595 = vadd.xlane.f32.xlu0 %v594
    %v596 = vpop.xlane.xlu0 %595
    %v597 = vrcp.pop 32.0
    %v598 = vmul.f32 %v593, %v597
    %v599 = vmul.f32 %v596, %v597
    %v600 = vsub.f32 %v589, %v598
    %v601 = vsub.f32 %v590, %v599
    %v602 = vmul.f32 %v600, %v600
    %v603 = vmul.f32 %v601, %v601
    %v604 = vsel %vm113, %v602, 0.0
    %605 = vadd.xlane.f32.xlu0 %v604
    %v606 = vpop.xlane.xlu0 %605
    %v607 = vsel %vm113, %v603, 0.0
    %608 = vadd.xlane.f32.xlu0 %v607
    %v609 = vpop.xlane.xlu0 %608
    %v610 = vmul.f32 %v606, %v597
    %v611 = vmul.f32 %v609, %v597
    %v612 = vadd.f32 %v610, 1e-12
    %v613 = vadd.f32 %v611, 1e-12
    %v614 = vrsqrt.pop %v612
    %v615 = vrsqrt.pop %v613
    %v616 = vmul.f32 %v600, %v614
    %v617 = vmul.f32 %v601, %v615
    %v618 = vlaneseq
    %v619 = vshrl.u32 %v618, 7
    %v620 = vsub.s32 1, %v619
    %v621 = vrot.slane %v36, %v620
    %v622 = vmul.f32 %v616, %v621
    %v623 = vmul.f32 %v617, %v621
    %v624 = vlaneseq
    %v625 = vshrl.u32 %v624, 7
    %v626 = vsub.s32 2, %v625
    %v627 = vrot.slane %v36, %v626
    %v628 = vadd.f32 %v622, %v627
    %v629 = vadd.f32 %v623, %v627
    %v630 = vpack.c.bf16 %v629, %v628
    %v631 = vld [vmem:[%s5] sm:$0xf]
    %v632 = vld [vmem:[%s5 + $0x4] sm:$0xf]
    %v633 = vld [vmem:[%s5 + $0x8] sm:$0xf]
    %v634 = vld [vmem:[%s5 + $0xc] sm:$0xf]
    %v635 = vld [vmem:[%s6] sm:$0x1]
    %v637 = vlaneseq
    %v638 = vshrl.u32 %v637, 7
    %v639 = vsub.s32 0, %v638
    %v640 = vrot.slane %v635, %v639
    %v646 = vunpack.c.l.b16 %v631
    %v647 = vunpack.c.l.b16 %v632
    %v648 = vunpack.c.l.b16 %v633
    %v649 = vunpack.c.l.b16 %v634
    %v650 = vpack.c.b16 %v647, %v646
    %v651 = vpack.c.b16 %v649, %v648
    %v655 = vsel %vm113, %v630, 0
    %657 = vmatprep.subr.bf16.mxu0 0
    %658 = vmatpush1.bf16.msra.mxu0 %v650
    %659 = vmatprep.subr.bf16.mxu0 0
    %660 = vmatpush1.bf16.msra.mxu0 %v651
    %661 = vmatprep.subr.bf16.mxu0 0
    %662 = vmatpush1.bf16.msra.mxu0 0
    %663 = vmatprep.subr.bf16.mxu0 0
    %664 = vmatpush1.bf16.msra.mxu0 0
    %665 = vmatprep.subr.bf16.mxu0 0
    %666 = vmatpush1.bf16.msra.mxu0 0
    %667 = vmatprep.subr.bf16.mxu0 0
    %668 = vmatpush1.bf16.msra.mxu0 0
    %669 = vmatprep.subr.bf16.mxu0 0
    %670 = vmatpush1.bf16.msra.mxu0 0
    %671 = vmatprep.subr.bf16.mxu0 0
    %672 = vmatpush1.bf16.msra.mxu0 0
    %673 = vmatprep.subr.bf16.mxu0 0
    %674 = vmatpush1.bf16.msra.mxu0 0
    %675 = vmatprep.subr.bf16.mxu0 0
    %676 = vmatpush1.bf16.msra.mxu0 0
    %677 = vmatprep.subr.bf16.mxu0 0
    %678 = vmatpush1.bf16.msra.mxu0 0
    %679 = vmatprep.subr.bf16.mxu0 0
    %680 = vmatpush1.bf16.msra.mxu0 0
    %681 = vmatprep.subr.bf16.mxu0 0
    %682 = vmatpush1.bf16.msra.mxu0 0
    %683 = vmatprep.subr.bf16.mxu0 0
    %684 = vmatpush1.bf16.msra.mxu0 0
    %685 = vmatprep.subr.bf16.mxu0 0
    %686 = vmatpush1.bf16.msra.mxu0 0
    %687 = vmatprep.subr.bf16.mxu0 0
    %688 = vmatpush1.bf16.msra.mxu0 0
    %689 = vmatprep.mubr.bf16.mxu0 0
    %690 = vmatmul.mubr.bf16.gmra.mrb[0].mxu0 %v655
    %v691 = vpop.f32.mrb[0].mxu0
    %v692 = vadd.f32 %v640, %v691
    %v693 = vpop.f32.mrb[0].mxu0
    %v694 = vpop.f32.mrb[0].mxu0
    %v695 = vadd.f32 %v640, %v694
    %v696 = vpop.f32.mrb[0].mxu0
    %697 = vdwg.mxu0
    %v698 = vmul.f32 %v692, 0.5
    %v699 = vmul.f32 %v695, 0.5
    %v700 = vmul.f32 %v692, 0.70710677
    %v701 = vmul.f32 %v695, 0.70710677
    %v702 = verf.f32.pop %v700
    %v703 = verf.f32.pop %v701
    %v704 = vadd.f32 %v702, 1.0
    %v705 = vadd.f32 %v703, 1.0
    %v706 = vmul.f32 %v698, %v704
    %v707 = vmul.f32 %v699, %v705
    %v708 = vpack.c.bf16 %v707, %v706
    %v709 = vld [vmem:[%s7] sm:$0xf]
    %v710 = vld [vmem:[%s7 + $0x4] sm:$0xf]
    %v711 = vld [vmem:[%s7 + $0x8] sm:$0xf]
    %v712 = vld [vmem:[%s7 + $0xc] sm:$0xf]
    %v713 = vld [vmem:[%s7 + $0x10] sm:$0xf]
    %v714 = vld [vmem:[%s7 + $0x14] sm:$0xf]
    %v715 = vld [vmem:[%s7 + $0x18] sm:$0xf]
    %v716 = vld [vmem:[%s7 + $0x1c] sm:$0xf]
    %v717 = vld [vmem:[%s7 + $0x20] sm:$0xf]
    %v718 = vld [vmem:[%s7 + $0x24] sm:$0xf]
    %v719 = vld [vmem:[%s7 + $0x28] sm:$0xf]
    %v720 = vld [vmem:[%s7 + $0x2c] sm:$0xf]
    %v721 = vld [vmem:[%s7 + $0x30] sm:$0xf]
    %v722 = vld [vmem:[%s7 + $0x34] sm:$0xf]
    %v723 = vld [vmem:[%s7 + $0x38] sm:$0xf]
    %v724 = vld [vmem:[%s7 + $0x3c] sm:$0xf]
    %v725 = vlaneseq
    %v726 = vshrl.u32 %v725, 7
    %v727 = vsub.s32 3, %v726
    %v728 = vrot.slane %v36, %v727
    %v745 = vunpack.c.l.b16 %v709
    %v746 = vunpack.c.l.b16 %v710
    %v747 = vunpack.c.l.b16 %v711
    %v748 = vunpack.c.l.b16 %v712
    %v749 = vunpack.c.l.b16 %v713
    %v750 = vunpack.c.l.b16 %v714
    %v751 = vunpack.c.l.b16 %v715
    %v752 = vunpack.c.l.b16 %v716
    %v753 = vunpack.c.l.b16 %v717
    %v754 = vunpack.c.l.b16 %v718
    %v755 = vunpack.c.l.b16 %v719
    %v756 = vunpack.c.l.b16 %v720
    %v757 = vunpack.c.l.b16 %v721
    %v758 = vunpack.c.l.b16 %v722
    %v759 = vunpack.c.l.b16 %v723
    %v760 = vunpack.c.l.b16 %v724
    %v761 = vpack.c.b16 %v746, %v745
    %v762 = vpack.c.b16 %v748, %v747
    %v763 = vpack.c.b16 %v750, %v749
    %v764 = vpack.c.b16 %v752, %v751
    %v765 = vpack.c.b16 %v754, %v753
    %v766 = vpack.c.b16 %v756, %v755
    %v767 = vpack.c.b16 %v758, %v757
    %v768 = vpack.c.b16 %v760, %v759
    %777 = vmatprep.subr.bf16.mxu0 0
    %778 = vmatpush1.bf16.msra.mxu0 %v761
    %779 = vmatprep.subr.bf16.mxu0 0
    %780 = vmatpush1.bf16.msra.mxu0 %v762
    %781 = vmatprep.subr.bf16.mxu0 0
    %782 = vmatpush1.bf16.msra.mxu0 %v763
    %783 = vmatprep.subr.bf16.mxu0 0
    %784 = vmatpush1.bf16.msra.mxu0 %v764
    %785 = vmatprep.subr.bf16.mxu0 0
    %786 = vmatpush1.bf16.msra.mxu0 %v765
    %787 = vmatprep.subr.bf16.mxu0 0
    %788 = vmatpush1.bf16.msra.mxu0 %v766
    %789 = vmatprep.subr.bf16.mxu0 0
    %790 = vmatpush1.bf16.msra.mxu0 %v767
    %791 = vmatprep.subr.bf16.mxu0 0
    %792 = vmatpush1.bf16.msra.mxu0 %v768
    %793 = vmatprep.subr.bf16.mxu0 0
    %794 = vmatpush1.bf16.msra.mxu0 0
    %795 = vmatprep.subr.bf16.mxu0 0
    %796 = vmatpush1.bf16.msra.mxu0 0
    %797 = vmatprep.subr.bf16.mxu0 0
    %798 = vmatpush1.bf16.msra.mxu0 0
    %799 = vmatprep.subr.bf16.mxu0 0
    %800 = vmatpush1.bf16.msra.mxu0 0
    %801 = vmatprep.subr.bf16.mxu0 0
    %802 = vmatpush1.bf16.msra.mxu0 0
    %803 = vmatprep.subr.bf16.mxu0 0
    %804 = vmatpush1.bf16.msra.mxu0 0
    %805 = vmatprep.subr.bf16.mxu0 0
    %806 = vmatpush1.bf16.msra.mxu0 0
    %807 = vmatprep.subr.bf16.mxu0 0
    %808 = vmatpush1.bf16.msra.mxu0 0
    %809 = vmatprep.mubr.bf16.mxu0 0
    %810 = vmatmul.mubr.bf16.gmra.mrb[0].mxu0 %v708
    %v811 = vpop.f32.mrb[0].mxu0
    %v812 = vadd.f32 %v728, %v811
    %v813 = vpop.f32.mrb[0].mxu0
    %v814 = vpop.f32.mrb[0].mxu0
    %v815 = vadd.f32 %v728, %v814
    %v816 = vpop.f32.mrb[0].mxu0
    %817 = vdwg.mxu0
    %v818 = vadd.f32 %v628, %v812
    %v819 = vadd.f32 %v629, %v815
    %v820 = vsel %vm113, %v818, 0.0
    %821 = vadd.xlane.f32.xlu0 %v820
    %v822 = vpop.xlane.xlu0 %821
    %v823 = vsel %vm113, %v819, 0.0
    %824 = vadd.xlane.f32.xlu0 %v823
    %v825 = vpop.xlane.xlu0 %824
    %v826 = vmul.f32 %v822, %v597
    %v827 = vmul.f32 %v825, %v597
    %v828 = vsub.f32 %v818, %v826
    %v829 = vsub.f32 %v819, %v827
    %v830 = vmul.f32 %v828, %v828
    %v831 = vmul.f32 %v829, %v829
    %v832 = vsel %vm113, %v830, 0.0
    %833 = vadd.xlane.f32.xlu0 %v832
    %v834 = vpop.xlane.xlu0 %833
    %v835 = vsel %vm113, %v831, 0.0
    %836 = vadd.xlane.f32.xlu0 %v835
    %v837 = vpop.xlane.xlu0 %836
    %v838 = vmul.f32 %v834, %v597
    %v839 = vmul.f32 %v837, %v597
    %v840 = vadd.f32 %v838, 1e-12
    %v841 = vadd.f32 %v839, 1e-12
    %v842 = vrsqrt.pop %v840
    %v843 = vrsqrt.pop %v841
    %v844 = vmul.f32 %v828, %v842
    %v845 = vmul.f32 %v829, %v843
    %v846 = vlaneseq
    %v847 = vshrl.u32 %v846, 7
    %v848 = vsub.s32 4, %v847
    %v849 = vrot.slane %v36, %v848
    %v850 = vmul.f32 %v844, %v849
    %v851 = vmul.f32 %v845, %v849
    %v852 = vlaneseq
    %v853 = vshrl.u32 %v852, 7
    %v854 = vsub.s32 5, %v853
    %v855 = vrot.slane %v36, %v854
    %v856 = vadd.f32 %v850, %v855
    %v857 = vadd.f32 %v851, %v855
    %858 = vst.msk [vmem:[#allocation2] sm:$0xff] %vm113, %v856
    %859 = vst.msk [vmem:[#allocation2 + $0x8] sm:$0xff] %vm113, %v857
    // Predicated region
    $region38: #{bert_layer.1} parent=1 // pred_check
      _
    $region39: #{bert_layer.1} parent=1 // pred_check_branch
      %861 = sbr.rel (0) target = $region41
    $region40: #{bert_layer.1} parent=1 // pred_region
      %s863 = ssub.s32 256, 256
      %864 = vsyncadd [#allocation3], %s863
      %s865 = sshll.u32 [#allocation2], 4
      %s866 = int_to_ptr.vmem [resolvable:$true] %s865
      %871 = dma.vmem_to_hbm [thread:$0]  %s866, 256, %s9, [#allocation3], 128, 128, 8
    $region41: #{bert_layer.1} parent=1 // pred_fallthru
      _
    // Predicated region
    $region42: #{bert_layer.1} parent=1 // pred_check
      _
    $region43: #{bert_layer.1} parent=1 // pred_check_branch
      %873 = sbr.rel (0) target = $region45
    $region44: #{bert_layer.1} parent=1 // pred_region
      %874 = dma.done [#allocation3], 256
    $region45: #{bert_layer.1} parent=1 // pred_fallthru
      _
    %875 = vsyncpa [#allocation3], 1

</llo_original>
